<compile_context>
chip_gen: v7x
topology: tpu7x:2x2x1
jax: 0.10.0
libtpu: 0.0.40
codegen_flags: <defaults>
</compile_context>

<pallas_src>
import functools

import jax
import jax.numpy as jnp
from jax.experimental import pallas as pl
from jax.experimental.pallas import tpu as pltpu


_VMEM_LIMIT_BYTES = 48 * 1024 * 1024    # scoped VMEM ceiling (safe on v5e/v6e/v7x)
_VMEM_INPUT_BUDGET = 24 * 1024 * 1024   # budget for double-buffered streaming inputs
_MAX_TM = 512                           # caps the in-kernel row-fold unroll
_N_SPLIT = 2                            # outer "parallel" axis (2 TCs on v7x)


def _pick_tm(n_rows, n_cols, itemsize, n_streams=2,
             budget_bytes=_VMEM_INPUT_BUDGET, cap=_MAX_TM):
    """Largest row tile (multiple of 8) whose double-buffered inputs fit VMEM."""
    per_row = n_streams * 2 * n_cols * max(int(itemsize), 1)
    tm = budget_bytes // per_row
    tm = min(tm, cap)
    if n_rows >= 8:
        # Keep tm <= floor(n_rows, 8) so at most one block per split is partial.
        tm = min(tm, (n_rows // 8) * 8)
    tm = max(8, (tm // 8) * 8)
    return int(tm)


def _row_fold(x, rows=8):
    """(tm, C) -> (rows, C) partial sums using only cross-vreg (VPU) adds.

    Slices are 8-row aligned (whole vregs), so no relayout / XLU work here.
    """
    tm = x.shape[0]
    acc = x[0:rows, :]
    for k in range(1, tm // rows):
        acc = acc + x[k * rows:(k + 1) * rows, :]
    return acc


def _split_grid(n_rows, tm):
    """Build the (n_split, blocks_per_split) reduction grid + input index map."""
    total_blocks = pl.cdiv(n_rows, tm)
    n_split = _N_SPLIT if total_blocks >= _N_SPLIT else 1
    bps = pl.cdiv(total_blocks, n_split)
    last_block = total_blocks - 1

    def in_map(p, i):
        # Clamp phantom trailing blocks; their rows are masked in-kernel.
        return (jnp.minimum(p * bps + i, last_block), 0)

    return n_split, bps, in_map


def _store_scalars(out_ref, values):
    """Write scalars into sublane rows 0..len-1 of the (8,128) output block."""
    rows = jax.lax.broadcasted_iota(jnp.int32, out_ref.shape, 0)
    tile = jnp.zeros(out_ref.shape, jnp.float32)
    for r, v in enumerate(values):
        tile = jnp.where(rows == r, v, tile)
    out_ref[...] = tile


# --------------------------------------------------------------------------
# Kernel 1: KD (KL-div) sum + task cross-entropy sum + valid-token count
# --------------------------------------------------------------------------
def _logits_loss_kernel(kd_temperature, n_rows,
                        s_ref, t_ref, lbl_ref, out_ref,
                        kd_acc, kd_row_acc, ce_lbl_acc, ce_row_acc, cnt_acc):
    p = pl.program_id(0)
    i = pl.program_id(1)
    n_inner = pl.num_programs(1)
    tm, V = s_ref.shape
    inv_t = 1.0 / kd_temperature

    @pl.when(i == 0)
    def _():
        kd_acc[...] = jnp.zeros_like(kd_acc)
        kd_row_acc[...] = jnp.zeros_like(kd_row_acc)
        ce_lbl_acc[...] = jnp.zeros_like(ce_lbl_acc)
        ce_row_acc[...] = jnp.zeros_like(ce_row_acc)
        cnt_acc[...] = jnp.zeros_like(cnt_acc)

    # Global (unclamped) row index -> tail / phantom-block mask.
    row = (p * n_inner + i) * tm + jax.lax.broadcasted_iota(jnp.int32, (tm, 1), 0)
    rvalid = row < n_rows                                         # (tm, 1) bool

    s = jnp.where(rvalid, s_ref[...].astype(jnp.float32), 0.0)    # (tm, V)
    t = jnp.where(rvalid, t_ref[...].astype(jnp.float32), 0.0)    # (tm, V)
    lbl = lbl_ref[...]                                            # (tm, 1) int32
    valid = jnp.logical_and(lbl >= 0, rvalid)                     # (tm, 1)
    valid_f = valid.astype(jnp.float32)

    # Row maxima (reused: max(s/T) == max(s)/T for T > 0).
    m_s = jnp.max(s, axis=-1, keepdims=True)
    m_t = jnp.max(t, axis=-1, keepdims=True)

    # --- KD: KL(softmax(t/T) || softmax(s/T)) --------------------------------
    # sum_j p_t*(lt - ls) = sum_j p_t*(zt - zs) + (log ssum - log tsum),
    # because sum_j p_t == 1.  Masked rows have s == t == 0 -> both terms 0.
    zs = (s - m_s) * inv_t
    zt = (t - m_t) * inv_t
    es = jnp.exp(zs)
    et = jnp.exp(zt)
    ssum = jnp.sum(es, axis=-1, keepdims=True)
    tsum = jnp.sum(et, axis=-1, keepdims=True)
    p_t = et * (1.0 / tsum)             # per-row reciprocal, not per-elem divide
    kd_elem = p_t * (zt - zs)                                     # (tm, V)
    c_row = jnp.log(ssum) - jnp.log(tsum)                         # (tm, 1)

    # --- task loss: CE(student_logits, labels), ignore_index=-100 ------------
    # CE_row = (m + logsumexp(s - m)) - s[label]; no one-hot / full log_softmax.
    if kd_temperature == 1.0:
        lse_s = jnp.log(ssum)                     # zs == s - m_s, reuse it
    else:
        lse_s = jnp.log(jnp.sum(jnp.exp(s - m_s), axis=-1, keepdims=True))
    ce_row = valid_f * (m_s + lse_s)                              # (tm, 1)
    col = jax.lax.broadcasted_iota(jnp.int32, (tm, V), 1)
    match = jnp.logical_and(col == lbl, valid)                    # (tm, V)
    ce_lbl_elem = jnp.where(match, s, 0.0)                        # s at label

    # --- deferred accumulation: pure VPU adds into VMEM accumulators ---------
    kd_acc[...] += _row_fold(kd_elem)
    kd_row_acc[...] += _row_fold(c_row)
    ce_lbl_acc[...] += _row_fold(ce_lbl_elem)
    ce_row_acc[...] += _row_fold(ce_row)
    cnt_acc[...] += _row_fold(valid_f)

    # --- single final cross-lane reduce + lane-dense (8,128) store -----------
    @pl.when(i == n_inner - 1)
    def _():
        kd = jnp.sum(kd_acc[...]) + jnp.sum(kd_row_acc[...])
        ce = jnp.sum(ce_row_acc[...]) - jnp.sum(ce_lbl_acc[...])
        cnt = jnp.sum(cnt_acc[...])
        _store_scalars(out_ref, (kd, ce, cnt))


def logits_losses(student_logits, teacher_logits, labels, kd_temperature):
    B, S, V = student_logits.shape
    R = B * S
    # No host-side f32 cast: stream the original dtype, cast after VMEM load.
    s2 = student_logits.reshape(R, V)
    t2 = teacher_logits.reshape(R, V)
    l2 = labels.reshape(R, 1).astype(jnp.int32)

    itemsize = max(s2.dtype.itemsize, t2.dtype.itemsize)
    tm = _pick_tm(R, V, itemsize, n_streams=2)
    n_split, bps, in_map = _split_grid(R, tm)

    kernel = functools.partial(_logits_loss_kernel, float(kd_temperature), int(R))
    out = pl.pallas_call(
        kernel,
        out_shape=jax.ShapeDtypeStruct((n_split * 8, 128), jnp.float32),
        grid_spec=pltpu.PrefetchScalarGridSpec(
            num_scalar_prefetch=0,
            grid=(n_split, bps),
            in_specs=[
                pl.BlockSpec((tm, V), in_map),
                pl.BlockSpec((tm, V), in_map),
                pl.BlockSpec((tm, 1), in_map),
            ],
            out_specs=pl.BlockSpec((8, 128), lambda p, i: (p, 0)),
            scratch_shapes=[
                pltpu.VMEM((8, V), jnp.float32),   # kd (tm,V) part
                pltpu.VMEM((8, 1), jnp.float32),   # kd per-row log-ratio part
                pltpu.VMEM((8, V), jnp.float32),   # s-at-label accumulator
                pltpu.VMEM((8, 1), jnp.float32),   # (m + lse) * valid accumulator
                pltpu.VMEM((8, 1), jnp.float32),   # valid-token count accumulator
            ],
        ),
        compiler_params=pltpu.CompilerParams(
            dimension_semantics=("parallel", "arbitrary"),
            vmem_limit_bytes=_VMEM_LIMIT_BYTES),
    )(s2, t2, l2)

    parts = out.reshape(n_split, 8, 128)
    kd_sum = jnp.sum(parts[:, 0, 0])
    ce_sum = jnp.sum(parts[:, 1, 0])
    cnt = jnp.sum(parts[:, 2, 0])
    return kd_sum, ce_sum, cnt


# --------------------------------------------------------------------------
# Kernel 2: sum of squared differences (for the hidden-state MSE loss)
# --------------------------------------------------------------------------
def _sq_diff_kernel(n_rows, s_ref, t_ref, out_ref, acc_ref):
    p = pl.program_id(0)
    i = pl.program_id(1)
    n_inner = pl.num_programs(1)
    tm = s_ref.shape[0]

    @pl.when(i == 0)
    def _():
        acc_ref[...] = jnp.zeros_like(acc_ref)

    row = (p * n_inner + i) * tm + jax.lax.broadcasted_iota(jnp.int32, (tm, 1), 0)
    rvalid = row < n_rows
    d = jnp.where(rvalid,
                  s_ref[...].astype(jnp.float32) - t_ref[...].astype(jnp.float32),
                  0.0)
    acc_ref[...] += _row_fold(d * d)

    @pl.when(i == n_inner - 1)
    def _():
        _store_scalars(out_ref, (jnp.sum(acc_ref[...]),))


def mse_mean(student_hs, teacher_hs):
    # student_hs / teacher_hs: [L, B, S, D]
    L, B, S, D = student_hs.shape
    R = L * B * S
    s2 = student_hs.reshape(R, D)          # no host-side dtype conversion
    t2 = teacher_hs.reshape(R, D)

    itemsize = max(s2.dtype.itemsize, t2.dtype.itemsize)
    tm = _pick_tm(R, D, itemsize, n_streams=2)
    n_split, bps, in_map = _split_grid(R, tm)

    out = pl.pallas_call(
        functools.partial(_sq_diff_kernel, int(R)),
        out_shape=jax.ShapeDtypeStruct((n_split * 8, 128), jnp.float32),
        grid_spec=pltpu.PrefetchScalarGridSpec(
            num_scalar_prefetch=0,
            grid=(n_split, bps),
            in_specs=[
                pl.BlockSpec((tm, D), in_map),
                pl.BlockSpec((tm, D), in_map),
            ],
            out_specs=pl.BlockSpec((8, 128), lambda p, i: (p, 0)),
            scratch_shapes=[pltpu.VMEM((8, D), jnp.float32)],
        ),
        compiler_params=pltpu.CompilerParams(
            dimension_semantics=("parallel", "arbitrary"),
            vmem_limit_bytes=_VMEM_LIMIT_BYTES),
    )(s2, t2)

    sq_sum = jnp.sum(out.reshape(n_split, 8, 128)[:, 0, 0])
    return sq_sum / jnp.float32(R * D)


# --------------------------------------------------------------------------
# Distillation forward (mirrors SwitchTransformersWrapperForDistillation.forward)
# --------------------------------------------------------------------------
def distillation_forward(teacher_logits, student_logits, labels,
                         teacher_enc_hs, student_enc_hs,
                         teacher_dec_hs, student_dec_hs,
                         *, mlm_lambda=1.0, kd_lambda=1.0, kd_temperature=1.0,
                         hd_lambda=0.0, hd_cos_sim=False,
                         reg_lambda=0.0, orth_reg_lambda=0.0,
                         sing_reg_lambda=0.0):
    B = student_logits.shape[0]

    kd_sum, ce_sum, cnt = logits_losses(
        student_logits, teacher_logits, labels, kd_temperature)

    # KLDivLoss(reduction='batchmean') divides the total sum by input.size(0)=B.
    kd_loss = (kd_sum / jnp.float32(B)) * kd_lambda
    # Student task loss = mean cross-entropy over non-ignored (-100) tokens.
    # (NaN if every label is ignored, matching the PyTorch behaviour.)
    task_loss = (ce_sum / cnt) * mlm_lambda

    # Hidden-state matching loss (hd_cos_sim=False path: elementwise MSE mean).
    # TODO(synk): CosineSimilarity path (hd_cos_sim=True) not implemented.
    enc_mse = mse_mean(student_enc_hs, teacher_enc_hs)
    dec_mse = mse_mean(student_dec_hs, teacher_dec_hs)
    hidden_states_loss = (enc_mse + dec_mse) / 2.0
    if hd_lambda == 0.0:
        hd_loss = jnp.float32(0.0)
    else:
        hd_loss = jnp.log(hidden_states_loss) * hd_lambda

    # Weight-based regularizers are exactly 0.0 with the default lambdas.
    # TODO(synk): compute_u_v_reg_for_next_rank / orthogonality / singular
    # sparsity regs need student expert weight matrices (not modeled here).
    norm_loss = jnp.float32(0.0)
    orth_reg_loss = jnp.float32(0.0)
    sing_reg_loss = jnp.float32(0.0)

    loss = kd_loss + task_loss + norm_loss + hd_loss + orth_reg_loss + sing_reg_loss
    return {
        "loss": loss,
        "student_logits": student_logits,
        "kd_loss": kd_loss,
        "hd_loss": hd_loss,
        "task_loss": task_loss,
        "norm_loss": norm_loss,
        "sing_reg_loss": sing_reg_loss,
        "orth_reg_loss": orth_reg_loss,
    }


# --------------------------------------------------------------------------
# Pure-JAX reference (for verification only)
# --------------------------------------------------------------------------
def _reference(teacher_logits, student_logits, labels,
               teacher_enc_hs, student_enc_hs,
               teacher_dec_hs, student_dec_hs,
               mlm_lambda, kd_lambda, kd_temperature, hd_lambda):
    B, S, V = student_logits.shape
    ls = jax.nn.log_softmax(student_logits / kd_temperature, axis=-1)
    lt = jax.nn.log_softmax(teacher_logits / kd_temperature, axis=-1)
    pt = jnp.exp(lt)
    kd = jnp.sum(jnp.where(pt > 0, pt * (lt - ls), 0.0)) / B * kd_lambda

    lsm = jax.nn.log_softmax(student_logits, axis=-1).reshape(-1, V)
    lbl = labels.reshape(-1)
    valid = lbl >= 0
    gathered = jnp.take_along_axis(
        lsm, jnp.clip(lbl, 0, V - 1)[:, None], axis=-1)[:, 0]
    ce = jnp.sum(jnp.where(valid, -gathered, 0.0)) / jnp.sum(valid)
    task = ce * mlm_lambda

    enc_mse = jnp.mean((student_enc_hs - teacher_enc_hs) ** 2)
    dec_mse = jnp.mean((student_dec_hs - teacher_dec_hs) ** 2)
    hsl = (enc_mse + dec_mse) / 2.0
    hd = jnp.log(hsl) * hd_lambda if hd_lambda != 0.0 else jnp.float32(0.0)
    return kd + task + hd, kd, task, hd


if __name__ == "__main__":
    # Small synthetic shapes consistent with a seq2seq Switch Transformer.
    # Odd sequence lengths are used on purpose so both the split ("parallel")
    # axis and the tail-row masking path are exercised (B*S = 18, L*B*S = 36
    # are not tile multiples).
    B, S_ENC, S_DEC, V, D = 2, 9, 9, 256, 128
    L_ENC, L_DEC = 2, 2          # number of (post-embedding) hidden states

    key = jax.random.PRNGKey(0)
    k = jax.random.split(key, 7)
    teacher_logits = jax.random.normal(k[0], (B, S_DEC, V), jnp.float32)
    student_logits = jax.random.normal(k[1], (B, S_DEC, V), jnp.float32)
    teacher_enc_hs = jax.random.normal(k[2], (L_ENC, B, S_ENC, D), jnp.float32)
    student_enc_hs = jax.random.normal(k[3], (L_ENC, B, S_ENC, D), jnp.float32)
    teacher_dec_hs = jax.random.normal(k[4], (L_DEC, B, S_DEC, D), jnp.float32)
    student_dec_hs = jax.random.normal(k[5], (L_DEC, B, S_DEC, D), jnp.float32)
    labels = jax.random.randint(k[6], (B, S_DEC), 0, V, jnp.int32)
    labels = labels.at[0, 0].set(-100).at[1, 3].set(-100)   # ignored tokens

    hyper = dict(mlm_lambda=1.0, kd_lambda=1.0, kd_temperature=2.0,
                 hd_lambda=1.0, hd_cos_sim=False)

    out = distillation_forward(
        teacher_logits, student_logits, labels,
        teacher_enc_hs, student_enc_hs,
        teacher_dec_hs, student_dec_hs, **hyper)
    jax.block_until_ready(out["loss"])

    ref_loss, ref_kd, ref_task, ref_hd = _reference(
        teacher_logits, student_logits, labels,
        teacher_enc_hs, student_enc_hs,
        teacher_dec_hs, student_dec_hs,
        hyper["mlm_lambda"], hyper["kd_lambda"],
        hyper["kd_temperature"], hyper["hd_lambda"])

    assert jnp.allclose(out["kd_loss"], ref_kd, atol=1e-4, rtol=1e-4)
    assert jnp.allclose(out["task_loss"], ref_task, atol=1e-4, rtol=1e-4)
    assert jnp.allclose(out["hd_loss"], ref_hd, atol=1e-4, rtol=1e-4)
    assert jnp.allclose(out["loss"], ref_loss, atol=1e-4, rtol=1e-4)

    print("KERNEL_OK")
</pallas_src>

<mosaic_0001>
module attributes {stable_mosaic.version = 11 : i64} {
  func.func @_logits_loss_kernel(%arg0: i32, %arg1: i32, %arg2: memref<16x256xf32, #tpu.memory_space<vmem>>, %arg3: memref<16x256xf32, #tpu.memory_space<vmem>>, %arg4: memref<16x1xi32, #tpu.memory_space<vmem>>, %arg5: memref<8x128xf32, #tpu.memory_space<vmem>>, %arg6: memref<8x256xf32, #tpu.memory_space<vmem>>, %arg7: memref<8x1xf32, #tpu.memory_space<vmem>>, %arg8: memref<8x256xf32, #tpu.memory_space<vmem>>, %arg9: memref<8x1xf32, #tpu.memory_space<vmem>>, %arg10: memref<8x1xf32, #tpu.memory_space<vmem>>) attributes {dimension_semantics = [#tpu.dimension_semantics<parallel>, #tpu.dimension_semantics<arbitrary>], iteration_bounds = array<i64: 2, 1>, scalar_prefetch = 0 : i64, scratch_operands = 5 : i64, tpu.core_type = #tpu.core_type<tc>, window_params = [{transform_indices = @transform_0, window_bounds = array<i64: 16, 256>}, {transform_indices = @transform_1, window_bounds = array<i64: 16, 256>}, {transform_indices = @transform_2, window_bounds = array<i64: 16, 1>}, {transform_indices = @transform_3, window_bounds = array<i64: 8, 128>}]} {
    %c0_i32 = arith.constant 0 : i32
    %0 = arith.cmpi eq, %arg1, %c0_i32 : i32
    %1 = arith.extui %0 : i1 to i32
    %c0_i32_0 = arith.constant 0 : i32
    %2 = arith.cmpi ne, %1, %c0_i32_0 : i32
    scf.if %2 {
      %cst_39 = arith.constant 0.000000e+00 : f32
      %102 = vector.broadcast %cst_39 : f32 to vector<8x256xf32>
      %c0_40 = arith.constant 0 : index
      %c0_41 = arith.constant 0 : index
      %103 = vector.load %arg6[%c0_40, %c0_41] : memref<8x256xf32, #tpu.memory_space<vmem>>, vector<8x256xf32>
      tpu.vector_store %arg6[%c0_40, %c0_41], %102 {strides = array<i32>} : memref<8x256xf32, #tpu.memory_space<vmem>>, vector<8x256xf32>,
      %cst_42 = arith.constant 0.000000e+00 : f32
      %104 = vector.broadcast %cst_42 : f32 to vector<8x1xf32>
      %c0_43 = arith.constant 0 : index
      %c0_44 = arith.constant 0 : index
      %105 = vector.load %arg7[%c0_43, %c0_44] : memref<8x1xf32, #tpu.memory_space<vmem>>, vector<8x1xf32>
      tpu.vector_store %arg7[%c0_43, %c0_44], %104 {strides = array<i32>} : memref<8x1xf32, #tpu.memory_space<vmem>>, vector<8x1xf32>,
      %cst_45 = arith.constant 0.000000e+00 : f32
      %106 = vector.broadcast %cst_45 : f32 to vector<8x256xf32>
      %c0_46 = arith.constant 0 : index
      %c0_47 = arith.constant 0 : index
      %107 = vector.load %arg8[%c0_46, %c0_47] : memref<8x256xf32, #tpu.memory_space<vmem>>, vector<8x256xf32>
      tpu.vector_store %arg8[%c0_46, %c0_47], %106 {strides = array<i32>} : memref<8x256xf32, #tpu.memory_space<vmem>>, vector<8x256xf32>,
      %cst_48 = arith.constant 0.000000e+00 : f32
      %108 = vector.broadcast %cst_48 : f32 to vector<8x1xf32>
      %c0_49 = arith.constant 0 : index
      %c0_50 = arith.constant 0 : index
      %109 = vector.load %arg9[%c0_49, %c0_50] : memref<8x1xf32, #tpu.memory_space<vmem>>, vector<8x1xf32>
      tpu.vector_store %arg9[%c0_49, %c0_50], %108 {strides = array<i32>} : memref<8x1xf32, #tpu.memory_space<vmem>>, vector<8x1xf32>,
      %cst_51 = arith.constant 0.000000e+00 : f32
      %110 = vector.broadcast %cst_51 : f32 to vector<8x1xf32>
      %c0_52 = arith.constant 0 : index
      %c0_53 = arith.constant 0 : index
      %111 = vector.load %arg10[%c0_52, %c0_53] : memref<8x1xf32, #tpu.memory_space<vmem>>, vector<8x1xf32>
      tpu.vector_store %arg10[%c0_52, %c0_53], %110 {strides = array<i32>} : memref<8x1xf32, #tpu.memory_space<vmem>>, vector<8x1xf32>,
    } else {
    }
    %c1_i32 = arith.constant 1 : i32
    %3 = arith.muli %arg0, %c1_i32 : i32
    %4 = arith.addi %3, %arg1 : i32
    %c16_i32 = arith.constant 16 : i32
    %5 = arith.muli %4, %c16_i32 : i32
    %6 = tpu.iota {dimensions = array<i32: 0>} : vector<16x1xi32>
    %7 = vector.broadcast %5 : i32 to vector<16x1xi32>
    %8 = arith.addi %7, %6 : vector<16x1xi32>
    %c18_i32 = arith.constant 18 : i32
    %9 = vector.broadcast %c18_i32 : i32 to vector<16x1xi32>
    %10 = arith.cmpi slt, %8, %9 : vector<16x1xi32>
    %c0 = arith.constant 0 : index
    %c0_1 = arith.constant 0 : index
    %11 = vector.load %arg2[%c0, %c0_1] : memref<16x256xf32, #tpu.memory_space<vmem>>, vector<16x256xf32>
    %cst = arith.constant 0.000000e+00 : f32
    %12 = vector.shape_cast %10 : vector<16x1xi1> to vector<16x1xi1>
    %13 = vector.broadcast %12 : vector<16x1xi1> to vector<16x256xi1>
    %14 = vector.broadcast %cst : f32 to vector<16x256xf32>
    %15 = arith.select %13, %11, %14 : vector<16x256xi1>, vector<16x256xf32>
    %c0_2 = arith.constant 0 : index
    %c0_3 = arith.constant 0 : index
    %16 = vector.load %arg3[%c0_2, %c0_3] : memref<16x256xf32, #tpu.memory_space<vmem>>, vector<16x256xf32>
    %cst_4 = arith.constant 0.000000e+00 : f32
    %17 = vector.shape_cast %10 : vector<16x1xi1> to vector<16x1xi1>
    %18 = vector.broadcast %17 : vector<16x1xi1> to vector<16x256xi1>
    %19 = vector.broadcast %cst_4 : f32 to vector<16x256xf32>
    %20 = arith.select %18, %16, %19 : vector<16x256xi1>, vector<16x256xf32>
    %c0_5 = arith.constant 0 : index
    %c0_6 = arith.constant 0 : index
    %21 = vector.load %arg4[%c0_5, %c0_6] : memref<16x1xi32, #tpu.memory_space<vmem>>, vector<16x1xi32>
    %c0_i32_7 = arith.constant 0 : i32
    %22 = vector.broadcast %c0_i32_7 : i32 to vector<16x1xi32>
    %23 = arith.cmpi sge, %21, %22 : vector<16x1xi32>
    %24 = arith.andi %23, %10 : vector<16x1xi1>
    %25 = arith.extui %24 : vector<16x1xi1> to vector<16x1xi32>
    %26 = arith.sitofp %25 : vector<16x1xi32> to vector<16x1xf32>
    %cst_8 = arith.constant dense<0xFF800000> : vector<16xf32>
    %27 = vector.multi_reduction <maximumf>, %15, %cst_8 [1] : vector<16x256xf32> to vector<16xf32>
    %28 = vector.shape_cast %27 : vector<16xf32> to vector<16x1xf32>
    %cst_9 = arith.constant dense<0xFF800000> : vector<16xf32>
    %29 = vector.multi_reduction <maximumf>, %20, %cst_9 [1] : vector<16x256xf32> to vector<16xf32>
    %30 = vector.shape_cast %29 : vector<16xf32> to vector<16x1xf32>
    %31 = vector.broadcast %28 : vector<16x1xf32> to vector<16x256xf32>
    %32 = arith.subf %15, %31 : vector<16x256xf32>
    %cst_10 = arith.constant 5.000000e-01 : f32
    %33 = vector.broadcast %cst_10 : f32 to vector<16x256xf32>
    %34 = arith.mulf %32, %33 : vector<16x256xf32>
    %35 = vector.broadcast %30 : vector<16x1xf32> to vector<16x256xf32>
    %36 = arith.subf %20, %35 : vector<16x256xf32>
    %cst_11 = arith.constant 5.000000e-01 : f32
    %37 = vector.broadcast %cst_11 : f32 to vector<16x256xf32>
    %38 = arith.mulf %36, %37 : vector<16x256xf32>
    %39 = math.exp %34 : vector<16x256xf32>
    %40 = math.exp %38 : vector<16x256xf32>
    %cst_12 = arith.constant dense<0.000000e+00> : vector<16xf32>
    %41 = vector.multi_reduction <add>, %39, %cst_12 [1] : vector<16x256xf32> to vector<16xf32>
    %42 = vector.shape_cast %41 : vector<16xf32> to vector<16x1xf32>
    %cst_13 = arith.constant dense<0.000000e+00> : vector<16xf32>
    %43 = vector.multi_reduction <add>, %40, %cst_13 [1] : vector<16x256xf32> to vector<16xf32>
    %44 = vector.shape_cast %43 : vector<16xf32> to vector<16x1xf32>
    %cst_14 = arith.constant 1.000000e+00 : f32
    %45 = vector.broadcast %cst_14 : f32 to vector<16x1xf32>
    %46 = arith.divf %45, %44 : vector<16x1xf32>
    %47 = vector.broadcast %46 : vector<16x1xf32> to vector<16x256xf32>
    %48 = arith.mulf %40, %47 : vector<16x256xf32>
    %49 = arith.subf %38, %34 : vector<16x256xf32>
    %50 = arith.mulf %48, %49 : vector<16x256xf32>
    %51 = math.log %42 : vector<16x1xf32>
    %52 = math.log %44 : vector<16x1xf32>
    %53 = arith.subf %51, %52 : vector<16x1xf32>
    %54 = vector.broadcast %28 : vector<16x1xf32> to vector<16x256xf32>
    %55 = arith.subf %15, %54 : vector<16x256xf32>
    %56 = math.exp %55 : vector<16x256xf32>
    %cst_15 = arith.constant dense<0.000000e+00> : vector<16xf32>
    %57 = vector.multi_reduction <add>, %56, %cst_15 [1] : vector<16x256xf32> to vector<16xf32>
    %58 = vector.shape_cast %57 : vector<16xf32> to vector<16x1xf32>
    %59 = math.log %58 : vector<16x1xf32>
    %60 = arith.addf %28, %59 : vector<16x1xf32>
    %61 = arith.mulf %26, %60 : vector<16x1xf32>
    %62 = tpu.iota {dimensions = array<i32: 1>} : vector<16x256xi32>
    %63 = vector.broadcast %21 : vector<16x1xi32> to vector<16x256xi32>
    %64 = arith.cmpi eq, %62, %63 : vector<16x256xi32>
    %65 = vector.broadcast %24 : vector<16x1xi1> to vector<16x256xi1>
    %66 = arith.andi %64, %65 : vector<16x256xi1>
    %cst_16 = arith.constant 0.000000e+00 : f32
    %67 = vector.broadcast %cst_16 : f32 to vector<16x256xf32>
    %68 = arith.select %66, %15, %67 : vector<16x256xi1>, vector<16x256xf32>
    %c0_17 = arith.constant 0 : index
    %c0_18 = arith.constant 0 : index
    %69 = vector.load %arg6[%c0_17, %c0_18] : memref<8x256xf32, #tpu.memory_space<vmem>>, vector<8x256xf32>
    %70 = vector.extract_strided_slice %50 {offsets = [0, 0], sizes = [8, 256], strides = [1, 1]} : vector<16x256xf32> to vector<8x256xf32>
    %71 = vector.extract_strided_slice %50 {offsets = [8, 0], sizes = [8, 256], strides = [1, 1]} : vector<16x256xf32> to vector<8x256xf32>
    %72 = arith.addf %70, %71 : vector<8x256xf32>
    %73 = arith.addf %69, %72 : vector<8x256xf32>
    %c0_19 = arith.constant 0 : index
    %c0_20 = arith.constant 0 : index
    %74 = vector.load %arg6[%c0_19, %c0_20] : memref<8x256xf32, #tpu.memory_space<vmem>>, vector<8x256xf32>
    tpu.vector_store %arg6[%c0_19, %c0_20], %73 {strides = array<i32>} : memref<8x256xf32, #tpu.memory_space<vmem>>, vector<8x256xf32>,
    %c0_21 = arith.constant 0 : index
    %c0_22 = arith.constant 0 : index
    %75 = vector.load %arg7[%c0_21, %c0_22] : memref<8x1xf32, #tpu.memory_space<vmem>>, vector<8x1xf32>
    %76 = vector.extract_strided_slice %53 {offsets = [0, 0], sizes = [8, 1], strides = [1, 1]} : vector<16x1xf32> to vector<8x1xf32>
    %77 = vector.extract_strided_slice %53 {offsets = [8, 0], sizes = [8, 1], strides = [1, 1]} : vector<16x1xf32> to vector<8x1xf32>
    %78 = arith.addf %76, %77 : vector<8x1xf32>
    %79 = arith.addf %75, %78 : vector<8x1xf32>
    %c0_23 = arith.constant 0 : index
    %c0_24 = arith.constant 0 : index
    %80 = vector.load %arg7[%c0_23, %c0_24] : memref<8x1xf32, #tpu.memory_space<vmem>>, vector<8x1xf32>
    tpu.vector_store %arg7[%c0_23, %c0_24], %79 {strides = array<i32>} : memref<8x1xf32, #tpu.memory_space<vmem>>, vector<8x1xf32>,
    %c0_25 = arith.constant 0 : index
    %c0_26 = arith.constant 0 : index
    %81 = vector.load %arg8[%c0_25, %c0_26] : memref<8x256xf32, #tpu.memory_space<vmem>>, vector<8x256xf32>
    %82 = vector.extract_strided_slice %68 {offsets = [0, 0], sizes = [8, 256], strides = [1, 1]} : vector<16x256xf32> to vector<8x256xf32>
    %83 = vector.extract_strided_slice %68 {offsets = [8, 0], sizes = [8, 256], strides = [1, 1]} : vector<16x256xf32> to vector<8x256xf32>
    %84 = arith.addf %82, %83 : vector<8x256xf32>
    %85 = arith.addf %81, %84 : vector<8x256xf32>
    %c0_27 = arith.constant 0 : index
    %c0_28 = arith.constant 0 : index
    %86 = vector.load %arg8[%c0_27, %c0_28] : memref<8x256xf32, #tpu.memory_space<vmem>>, vector<8x256xf32>
    tpu.vector_store %arg8[%c0_27, %c0_28], %85 {strides = array<i32>} : memref<8x256xf32, #tpu.memory_space<vmem>>, vector<8x256xf32>,
    %c0_29 = arith.constant 0 : index
    %c0_30 = arith.constant 0 : index
    %87 = vector.load %arg9[%c0_29, %c0_30] : memref<8x1xf32, #tpu.memory_space<vmem>>, vector<8x1xf32>
    %88 = vector.extract_strided_slice %61 {offsets = [0, 0], sizes = [8, 1], strides = [1, 1]} : vector<16x1xf32> to vector<8x1xf32>
    %89 = vector.extract_strided_slice %61 {offsets = [8, 0], sizes = [8, 1], strides = [1, 1]} : vector<16x1xf32> to vector<8x1xf32>
    %90 = arith.addf %88, %89 : vector<8x1xf32>
    %91 = arith.addf %87, %90 : vector<8x1xf32>
    %c0_31 = arith.constant 0 : index
    %c0_32 = arith.constant 0 : index
    %92 = vector.load %arg9[%c0_31, %c0_32] : memref<8x1xf32, #tpu.memory_space<vmem>>, vector<8x1xf32>
    tpu.vector_store %arg9[%c0_31, %c0_32], %91 {strides = array<i32>} : memref<8x1xf32, #tpu.memory_space<vmem>>, vector<8x1xf32>,
    %c0_33 = arith.constant 0 : index
    %c0_34 = arith.constant 0 : index
    %93 = vector.load %arg10[%c0_33, %c0_34] : memref<8x1xf32, #tpu.memory_space<vmem>>, vector<8x1xf32>
    %94 = vector.extract_strided_slice %26 {offsets = [0, 0], sizes = [8, 1], strides = [1, 1]} : vector<16x1xf32> to vector<8x1xf32>
    %95 = vector.extract_strided_slice %26 {offsets = [8, 0], sizes = [8, 1], strides = [1, 1]} : vector<16x1xf32> to vector<8x1xf32>
    %96 = arith.addf %94, %95 : vector<8x1xf32>
    %97 = arith.addf %93, %96 : vector<8x1xf32>
    %c0_35 = arith.constant 0 : index
    %c0_36 = arith.constant 0 : index
    %98 = vector.load %arg10[%c0_35, %c0_36] : memref<8x1xf32, #tpu.memory_space<vmem>>, vector<8x1xf32>
    tpu.vector_store %arg10[%c0_35, %c0_36], %97 {strides = array<i32>} : memref<8x1xf32, #tpu.memory_space<vmem>>, vector<8x1xf32>,
    %c0_i32_37 = arith.constant 0 : i32
    %99 = arith.cmpi eq, %arg1, %c0_i32_37 : i32
    %100 = arith.extui %99 : i1 to i32
    %c0_i32_38 = arith.constant 0 : i32
    %101 = arith.cmpi ne, %100, %c0_i32_38 : i32
    scf.if %101 {
      %c0_39 = arith.constant 0 : index
      %c0_40 = arith.constant 0 : index
      %102 = vector.load %arg6[%c0_39, %c0_40] : memref<8x256xf32, #tpu.memory_space<vmem>>, vector<8x256xf32>
      %103 = vector.shape_cast %102 : vector<8x256xf32> to vector<1x8x256xf32>
      %cst_41 = arith.constant dense<0.000000e+00> : vector<1xf32>
      %104 = vector.multi_reduction <add>, %103, %cst_41 [1, 2] : vector<1x8x256xf32> to vector<1xf32>
      %105 = vector.shape_cast %104 : vector<1xf32> to vector<1x1x1xf32>
      %106 = vector.extract %105[0, 0, 0] : f32 from vector<1x1x1xf32>
      %c0_42 = arith.constant 0 : index
      %c0_43 = arith.constant 0 : index
      %107 = vector.load %arg7[%c0_42, %c0_43] : memref<8x1xf32, #tpu.memory_space<vmem>>, vector<8x1xf32>
      %108 = vector.shape_cast %107 : vector<8x1xf32> to vector<1x8x1xf32>
      %cst_44 = arith.constant dense<0.000000e+00> : vector<1xf32>
      %109 = vector.multi_reduction <add>, %108, %cst_44 [1, 2] : vector<1x8x1xf32> to vector<1xf32>
      %110 = vector.shape_cast %109 : vector<1xf32> to vector<1x1x1xf32>
      %111 = vector.extract %110[0, 0, 0] : f32 from vector<1x1x1xf32>
      %112 = arith.addf %106, %111 : f32
      %c0_45 = arith.constant 0 : index
      %c0_46 = arith.constant 0 : index
      %113 = vector.load %arg9[%c0_45, %c0_46] : memref<8x1xf32, #tpu.memory_space<vmem>>, vector<8x1xf32>
      %114 = vector.shape_cast %113 : vector<8x1xf32> to vector<1x8x1xf32>
      %cst_47 = arith.constant dense<0.000000e+00> : vector<1xf32>
      %115 = vector.multi_reduction <add>, %114, %cst_47 [1, 2] : vector<1x8x1xf32> to vector<1xf32>
      %116 = vector.shape_cast %115 : vector<1xf32> to vector<1x1x1xf32>
      %117 = vector.extract %116[0, 0, 0] : f32 from vector<1x1x1xf32>
      %c0_48 = arith.constant 0 : index
      %c0_49 = arith.constant 0 : index
      %118 = vector.load %arg8[%c0_48, %c0_49] : memref<8x256xf32, #tpu.memory_space<vmem>>, vector<8x256xf32>
      %119 = vector.shape_cast %118 : vector<8x256xf32> to vector<1x8x256xf32>
      %cst_50 = arith.constant dense<0.000000e+00> : vector<1xf32>
      %120 = vector.multi_reduction <add>, %119, %cst_50 [1, 2] : vector<1x8x256xf32> to vector<1xf32>
      %121 = vector.shape_cast %120 : vector<1xf32> to vector<1x1x1xf32>
      %122 = vector.extract %121[0, 0, 0] : f32 from vector<1x1x1xf32>
      %123 = arith.subf %117, %122 : f32
      %c0_51 = arith.constant 0 : index
      %c0_52 = arith.constant 0 : index
      %124 = vector.load %arg10[%c0_51, %c0_52] : memref<8x1xf32, #tpu.memory_space<vmem>>, vector<8x1xf32>
      %125 = vector.shape_cast %124 : vector<8x1xf32> to vector<1x8x1xf32>
      %cst_53 = arith.constant dense<0.000000e+00> : vector<1xf32>
      %126 = vector.multi_reduction <add>, %125, %cst_53 [1, 2] : vector<1x8x1xf32> to vector<1xf32>
      %127 = vector.shape_cast %126 : vector<1xf32> to vector<1x1x1xf32>
      %128 = vector.extract %127[0, 0, 0] : f32 from vector<1x1x1xf32>
      %129 = tpu.iota {dimensions = array<i32: 0>} : vector<8x128xi32>
      %cst_54 = arith.constant 0.000000e+00 : f32
      %130 = vector.broadcast %cst_54 : f32 to vector<8x128xf32>
      %c0_i32_55 = arith.constant 0 : i32
      %131 = vector.broadcast %c0_i32_55 : i32 to vector<8x128xi32>
      %132 = arith.cmpi eq, %129, %131 : vector<8x128xi32>
      %133 = vector.broadcast %112 : f32 to vector<8x128xf32>
      %134 = arith.select %132, %133, %130 : vector<8x128xi1>, vector<8x128xf32>
      %c1_i32_56 = arith.constant 1 : i32
      %135 = vector.broadcast %c1_i32_56 : i32 to vector<8x128xi32>
      %136 = arith.cmpi eq, %129, %135 : vector<8x128xi32>
      %137 = vector.broadcast %123 : f32 to vector<8x128xf32>
      %138 = arith.select %136, %137, %134 : vector<8x128xi1>, vector<8x128xf32>
      %c2_i32 = arith.constant 2 : i32
      %139 = vector.broadcast %c2_i32 : i32 to vector<8x128xi32>
      %140 = arith.cmpi eq, %129, %139 : vector<8x128xi32>
      %141 = vector.broadcast %128 : f32 to vector<8x128xf32>
      %142 = arith.select %140, %141, %138 : vector<8x128xi1>, vector<8x128xf32>
      %c0_57 = arith.constant 0 : index
      %c0_58 = arith.constant 0 : index
      %143 = vector.load %arg5[%c0_57, %c0_58] : memref<8x128xf32, #tpu.memory_space<vmem>>, vector<8x128xf32>
      tpu.vector_store %arg5[%c0_57, %c0_58], %142 {strides = array<i32>} : memref<8x128xf32, #tpu.memory_space<vmem>>, vector<8x128xf32>,
    } else {
    }
    return
  }
  func.func @transform_0(%arg0: i32, %arg1: i32) -> (i32, i32) {
    %c1_i32 = arith.constant 1 : i32
    %0 = arith.muli %arg0, %c1_i32 : i32
    %1 = arith.addi %0, %arg1 : i32
    %c1_i32_0 = arith.constant 1 : i32
    %2 = arith.minsi %1, %c1_i32_0 : i32
    %c0_i32 = arith.constant 0 : i32
    %c0_i32_1 = arith.constant 0 : i32
    return %2, %c0_i32 : i32, i32
  }
  func.func @transform_1(%arg0: i32, %arg1: i32) -> (i32, i32) {
    %c1_i32 = arith.constant 1 : i32
    %0 = arith.muli %arg0, %c1_i32 : i32
    %1 = arith.addi %0, %arg1 : i32
    %c1_i32_0 = arith.constant 1 : i32
    %2 = arith.minsi %1, %c1_i32_0 : i32
    %c0_i32 = arith.constant 0 : i32
    %c0_i32_1 = arith.constant 0 : i32
    return %2, %c0_i32 : i32, i32
  }
  func.func @transform_2(%arg0: i32, %arg1: i32) -> (i32, i32) {
    %c1_i32 = arith.constant 1 : i32
    %0 = arith.muli %arg0, %c1_i32 : i32
    %1 = arith.addi %0, %arg1 : i32
    %c1_i32_0 = arith.constant 1 : i32
    %2 = arith.minsi %1, %c1_i32_0 : i32
    %c0_i32 = arith.constant 0 : i32
    %c0_i32_1 = arith.constant 0 : i32
    return %2, %c0_i32 : i32, i32
  }
  func.func @transform_3(%arg0: i32, %arg1: i32) -> (i32, i32) {
    %c0_i32 = arith.constant 0 : i32
    %c0_i32_0 = arith.constant 0 : i32
    return %arg0, %c0_i32 : i32, i32
  }
}

</mosaic_0001>

<llo_original>
// kernel: tpu_custom_call.1
$region0: #{tpu_custom_call.1}
  #allocation0 [shape = 'u32[]', space=smem, size = 0x4, offset = 0x4, fixed_abs, tag = 'smem constant byte address 0x4 - core index']
  #allocation1 [shape = 'u32[144,128]{1,0:T(1,128)}', space=vmem, size = 0x12000, scoped, tag = 'internal scratch']
  #allocation2 [shape = 'f32[8,256]{1,0:T(8,128)}', space=vmem, size = 0x2000, scoped, tag = 'scratch operand']
  #allocation3 [shape = 'f32[8,1]{1,0:T(8,128)}', space=vmem, size = 0x1000, scoped, tag = 'scratch operand']
  #allocation4 [shape = 'f32[8,256]{1,0:T(8,128)}', space=vmem, size = 0x2000, scoped, tag = 'scratch operand']
  #allocation5 [shape = 'f32[8,1]{1,0:T(8,128)}', space=vmem, size = 0x1000, scoped, tag = 'scratch operand']
  #allocation6 [shape = 'f32[8,1]{1,0:T(8,128)}', space=vmem, size = 0x1000, scoped, tag = 'scratch operand']
  %s0 = inlined_call_operand.hbm [shape: f32[18,256], index: 0, kind: input, shape index: {}]
  %s1 = inlined_call_operand.hbm [shape: f32[18,256], index: 1, kind: input, shape index: {}]
  %s2 = inlined_call_operand.vmem [shape: s32[18,1], index: 2, kind: input, shape index: {}]
  %s3 = inlined_call_operand.hbm [shape: f32[16,128], index: 3, kind: output, shape index: {}]
  %s4 = sld [smem:[#allocation0]]
  $region61: #{tpu_custom_call.1} parent=0
    _
  %s6 = ssub.s32 1, %s4
  %s7 = scalar_select 0, %s6, %s4
  $region1: #{tpu_custom_call.1} parent=0
    #allocation7 [shape = 'u8[32768]{0}', space=vmem, size = 0x8000, scoped, tag = 'input window, operand 0']
    #allocation8 [shape = 's32[2]{0}', space=sflag, size = 0x8, scoped, tag = 'scoped memory for tpu_custom_call.1']
    #allocation9 [shape = 's32[2]{0}', space=sflag, size = 0x8, scoped, tag = 'scoped memory for tpu_custom_call.1']
    #allocation10 [shape = 'u8[32768]{0}', space=vmem, size = 0x8000, scoped, tag = 'input window, operand 1']
    #allocation11 [shape = 's32[2]{0}', space=sflag, size = 0x8, scoped, tag = 'scoped memory for tpu_custom_call.1']
    #allocation12 [shape = 'u8[8192]{0}', space=vmem, size = 0x2000, scoped, tag = 'output window, operand 0']
    %8 = vsyncpa [#allocation8], 0
    %s9 = scalar_lea.sflag [#allocation8], 1
    %10 = vsyncpa %s9, 0
    %11 = vsyncpa [#allocation11], 0
    %s12 = scalar_lea.sflag [#allocation11], 1
    %13 = vsyncpa %s12, 0
    %14 = vsyncpa [#allocation9], 0
    %s15 = scalar_lea.sflag [#allocation9], 1
    %16 = vsyncpa %s15, 0
    loop: start=0, step=1, limit=4
    $region2: #{tpu_custom_call.1} parent=1 // loop_pre_header
      _
    $region3: #{tpu_custom_call.1} parent=1 // loop_header
      %s18 = sphi 0, %s22
      %p19 = scmp.ge.s32.totalorder %s18, 4
      %s25 = sphi 0, %s37
      %s26 = sphi 0, %s33
      %s27 = sphi 0, %s25
      %s28 = sphi 0, %s26
      %s29 = sphi 0, %s27
      %s30 = sphi 0, %s28
      %s46 = sphi 0, %s48
      %s49 = sphi 0, %s46
      %s50 = sphi 0, %s49
      %s66 = sphi 0, %s50
      %s78 = sphi 0, %s80
      %s81 = sphi 0, %s78
      %s82 = sphi 0, %s81
      %s98 = sphi 0, %s82
      %s110 = sphi 0, %s112
      %s113 = sphi 0, %s110
      %s114 = sphi 0, %s113
      %s130 = sphi 0, %s114
      %s136 = sphi 0, %s138
      %s139 = sphi 0, %s136
      %s140 = sphi 0, %s139
      %s156 = sphi 0, %s140
    $region4: #{tpu_custom_call.1} parent=1 // loop_header_branch
      %21 = sbr.rel (%p19) target = $region8
    $region5: #{tpu_custom_call.1} parent=1 // loop_body
      %s23 = ssub.s32 %s18, 1
      %s24 = ssub.s32 %s18, 2
      %s31 = sadd.s32 1, %s26
      %p32 = scmp.ge.s32.totalorder %s31, 1
      %s33 = scalar_select %p32, 0, %s31
      %s34 = sadd.s32 1, %s25
      %s35 = scalar_select %p32, %s34, %s25
      %p36 = scmp.ge.s32.totalorder %s35, 2
      %s37 = scalar_select %p36, 0, %s35
      %s38 = sadd.s32 %s25, %s26
      %p39 = scmp.lt.s32.totalorder %s38, 1
      %s40 = scalar_select %p39, %s38, 1
      %s41 = sadd.s32 %s37, %s33
      %p42 = scmp.lt.s32.totalorder %s41, 1
      %s43 = scalar_select %p42, %s41, 1
      %s44 = ssub.s32 %s40, %s43
      %p45 = scmp.eq.s32.totalorder %s44, 0
      %s47 = sadd.s32 %s46, 1
      %s48 = scalar_select %p45, %s46, %s47
      %p51 = pneg %p45
      %p52 = scmp.eq.s32.totalorder %s18, 1
      %p53 = por %p51, %p52
      %p54 = scmp.ne.s32.totalorder %s46, %s49
      %p55 = scmp.eq.s32.totalorder %s18, 0
      %p56 = por %p54, %p55
      %p57 = scmp.ne.s32.totalorder %s46, %s49
      %p58 = scmp.eq.s32.totalorder %s23, 1
      %p59 = por %p57, %p58
      %p60 = scmp.ne.s32.totalorder %s49, %s50
      %p61 = scmp.eq.s32.totalorder %s23, 0
      %p62 = por %p60, %p61
      %p63 = scmp.ne.s32.totalorder %s49, %s50
      %p64 = scmp.eq.s32.totalorder %s24, 1
      %p65 = por %p63, %p64
      %p67 = scmp.ne.s32.totalorder %s50, %s66
      %p68 = scmp.eq.s32.totalorder %s24, 0
      %p69 = por %p67, %p68
      %s70 = sadd.s32 %s25, %s26
      %p71 = scmp.lt.s32.totalorder %s70, 1
      %s72 = scalar_select %p71, %s70, 1
      %s73 = sadd.s32 %s37, %s33
      %p74 = scmp.lt.s32.totalorder %s73, 1
      %s75 = scalar_select %p74, %s73, 1
      %s76 = ssub.s32 %s72, %s75
      %p77 = scmp.eq.s32.totalorder %s76, 0
      %s79 = sadd.s32 %s78, 1
      %s80 = scalar_select %p77, %s78, %s79
      %p83 = pneg %p77
      %p84 = scmp.eq.s32.totalorder %s18, 1
      %p85 = por %p83, %p84
      %p86 = scmp.ne.s32.totalorder %s78, %s81
      %p87 = scmp.eq.s32.totalorder %s18, 0
      %p88 = por %p86, %p87
      %p89 = scmp.ne.s32.totalorder %s78, %s81
      %p90 = scmp.eq.s32.totalorder %s23, 1
      %p91 = por %p89, %p90
      %p92 = scmp.ne.s32.totalorder %s81, %s82
      %p93 = scmp.eq.s32.totalorder %s23, 0
      %p94 = por %p92, %p93
      %p95 = scmp.ne.s32.totalorder %s81, %s82
      %p96 = scmp.eq.s32.totalorder %s24, 1
      %p97 = por %p95, %p96
      %p99 = scmp.ne.s32.totalorder %s82, %s98
      %p100 = scmp.eq.s32.totalorder %s24, 0
      %p101 = por %p99, %p100
      %s102 = sadd.s32 %s25, %s26
      %p103 = scmp.lt.s32.totalorder %s102, 1
      %s104 = scalar_select %p103, %s102, 1
      %s105 = sadd.s32 %s37, %s33
      %p106 = scmp.lt.s32.totalorder %s105, 1
      %s107 = scalar_select %p106, %s105, 1
      %s108 = ssub.s32 %s104, %s107
      %p109 = scmp.eq.s32.totalorder %s108, 0
      %s111 = sadd.s32 %s110, 1
      %s112 = scalar_select %p109, %s110, %s111
      %p115 = pneg %p109
      %p116 = scmp.eq.s32.totalorder %s18, 1
      %p117 = por %p115, %p116
      %p118 = scmp.ne.s32.totalorder %s110, %s113
      %p119 = scmp.eq.s32.totalorder %s18, 0
      %p120 = por %p118, %p119
      %p121 = scmp.ne.s32.totalorder %s110, %s113
      %p122 = scmp.eq.s32.totalorder %s23, 1
      %p123 = por %p121, %p122
      %p124 = scmp.ne.s32.totalorder %s113, %s114
      %p125 = scmp.eq.s32.totalorder %s23, 0
      %p126 = por %p124, %p125
      %p127 = scmp.ne.s32.totalorder %s113, %s114
      %p128 = scmp.eq.s32.totalorder %s24, 1
      %p129 = por %p127, %p128
      %p131 = scmp.ne.s32.totalorder %s114, %s130
      %p132 = scmp.eq.s32.totalorder %s24, 0
      %p133 = por %p131, %p132
      %s134 = ssub.s32 %s25, %s37
      %p135 = scmp.eq.s32.totalorder %s134, 0
      %s137 = sadd.s32 %s136, 1
      %s138 = scalar_select %p135, %s136, %s137
      %p141 = pneg %p135
      %p142 = scmp.eq.s32.totalorder %s18, 1
      %p143 = por %p141, %p142
      %p144 = scmp.ne.s32.totalorder %s136, %s139
      %p145 = scmp.eq.s32.totalorder %s18, 0
      %p146 = por %p144, %p145
      %p147 = scmp.ne.s32.totalorder %s136, %s139
      %p148 = scmp.eq.s32.totalorder %s23, 1
      %p149 = por %p147, %p148
      %p150 = scmp.ne.s32.totalorder %s139, %s140
      %p151 = scmp.eq.s32.totalorder %s23, 0
      %p152 = por %p150, %p151
      %p153 = scmp.ne.s32.totalorder %s139, %s140
      %p154 = scmp.eq.s32.totalorder %s24, 1
      %p155 = por %p153, %p154
      %p157 = scmp.ne.s32.totalorder %s140, %s156
      %p158 = scmp.eq.s32.totalorder %s24, 0
      %p159 = por %p157, %p158
      %p160 = scmp.le.s32.totalorder 1, %s18
      %p161 = scmp.lt.s32.totalorder %s18, 3
      %p162 = pnand %p160, %p161
      %p163 = pneg %p162
      // Predicated region
      $region9: #{tpu_custom_call.1} parent=5 // pred_check
        _
      $region10: #{tpu_custom_call.1} parent=5 // pred_check_branch
        %165 = sbr.rel (%p162) target = $region12
      $region11: #{tpu_custom_call.1} parent=5 // pred_region
        %s166 = ssub.s32 %s18, 1
      $region12: #{tpu_custom_call.1} parent=5 // pred_fallthru
        _
      %p167 = scmp.lt.s32.totalorder %s18, 2
      // Predicated region
      $region13: #{tpu_custom_call.1} parent=5 // pred_check
        %p168 = pneg %p167
      $region14: #{tpu_custom_call.1} parent=5 // pred_check_branch
        %170 = sbr.rel (%p168) target = $region16
      $region15: #{tpu_custom_call.1} parent=5 // pred_region
        // Predicated region
        $region17: #{tpu_custom_call.1} parent=15 // pred_check
          %p171 = pneg %p56
        $region18: #{tpu_custom_call.1} parent=15 // pred_check_branch
          %173 = sbr.rel (%p171) target = $region20
        $region19: #{tpu_custom_call.1} parent=15 // pred_region
          %s174 = sand.u32 %s46, 1
          %s175 = scalar_lea.sflag [#allocation8], %s174
          %s176 = sand.u32 %s46, 1
          %s177 = smul.addr %s176, 32
          %s178 = scalar_lea.vmem [#allocation7], %s177
          %s179 = sadd.s32 %s25, %s26
          %p180 = scmp.lt.s32.totalorder %s179, 1
          %s181 = scalar_select %p180, %s179, 1
          %s182 = smul.u32 2, %s181
          %s183 = ssub.s32 3, %s182
          %p184 = scmp.lt.s32.totalorder %s183, 2
          %s185 = scalar_select %p184, %s183, 2
          %s186 = smul.u32 128, %s185
          %s187 = smul.u32 %s186, 2
          %s189 = ssub.s32 512, %s187
          %190 = vsyncadd %s175, %s189
          %p191 = scmp.ne.s32.totalorder 0, %s187
          %s192 = smul.addr %s182, 2
          %s193 = smul.addr %s192, 128
          %s194 = scalar_lea.hbm %s0, %s193
          %s195 = smul.u32 16, %s185
          %s196 = sshll.u32 %s178, 4
          %s197 = int_to_ptr.vmem [resolvable:$true] %s196
          %s198 = sshll.u32 %s195, 4
          %202 = dma.hbm_to_vmem [thread:$0]  (%p191), %s194, %s198, %s197, %s175, 256, 256, 16
        $region20: #{tpu_custom_call.1} parent=15 // pred_fallthru
          _
        // Predicated region
        $region21: #{tpu_custom_call.1} parent=15 // pred_check
          %p203 = pneg %p88
        $region22: #{tpu_custom_call.1} parent=15 // pred_check_branch
          %205 = sbr.rel (%p203) target = $region24
        $region23: #{tpu_custom_call.1} parent=15 // pred_region
          %s206 = sand.u32 %s78, 1
          %s207 = scalar_lea.sflag [#allocation11], %s206
          %s208 = sand.u32 %s78, 1
          %s209 = smul.addr %s208, 32
          %s210 = scalar_lea.vmem [#allocation10], %s209
          %s211 = sadd.s32 %s25, %s26
          %p212 = scmp.lt.s32.totalorder %s211, 1
          %s213 = scalar_select %p212, %s211, 1
          %s214 = smul.u32 2, %s213
          %s215 = ssub.s32 3, %s214
          %p216 = scmp.lt.s32.totalorder %s215, 2
          %s217 = scalar_select %p216, %s215, 2
          %s218 = smul.u32 128, %s217
          %s219 = smul.u32 %s218, 2
          %s221 = ssub.s32 512, %s219
          %222 = vsyncadd %s207, %s221
          %p223 = scmp.ne.s32.totalorder 0, %s219
          %s224 = smul.addr %s214, 2
          %s225 = smul.addr %s224, 128
          %s226 = scalar_lea.hbm %s1, %s225
          %s227 = smul.u32 16, %s217
          %s228 = sshll.u32 %s210, 4
          %s229 = int_to_ptr.vmem [resolvable:$true] %s228
          %s230 = sshll.u32 %s227, 4
          %234 = dma.hbm_to_vmem [thread:$0]  (%p223), %s226, %s230, %s229, %s207, 256, 256, 16
        $region24: #{tpu_custom_call.1} parent=15 // pred_fallthru
          _
        // Predicated region
        $region25: #{tpu_custom_call.1} parent=15 // pred_check
          %p235 = pneg %p120
        $region26: #{tpu_custom_call.1} parent=15 // pred_check_branch
          %237 = sbr.rel (%p235) target = $region28
        $region27: #{tpu_custom_call.1} parent=15 // pred_region
          %s238 = sadd.s32 %s25, %s26
          %p239 = scmp.lt.s32.totalorder %s238, 1
          %s240 = scalar_select %p239, %s238, 1
          %s241 = smul.u32 2, %s240
          %s242 = ssub.s32 3, %s241
          %p243 = scmp.lt.s32.totalorder %s242, 2
          %s244 = scalar_select %p243, %s242, 2
          %s245 = smul.u32 128, %s244
          %p246 = scmp.lt.s32.totalorder %s241, 2
          %s247 = scalar_select %p246, %s241, 2
          %s248 = smul.addr %s247, 8
          %s249 = scalar_lea.vmem %s2, %s248
          %s250 = sadd.s32 %s25, %s26
          %p251 = scmp.lt.s32.totalorder %s250, 1
          %s252 = scalar_select %p251, %s250, 1
          %s253 = smul.u32 2, %s252
          %s254 = ssub.s32 3, %s253
          %p255 = scmp.lt.s32.totalorder %s254, 2
          %s256 = scalar_select %p255, %s254, 2
          %s257 = smul.u32 128, %s256
        $region28: #{tpu_custom_call.1} parent=15 // pred_fallthru
          _
      $region16: #{tpu_custom_call.1} parent=5 // pred_fallthru
        _
      %p258 = scmp.le.s32.totalorder 1, %s18
      %p259 = scmp.lt.s32.totalorder %s18, 3
      %p260 = pnand %p258, %p259
      %p261 = pneg %p260
      // Predicated region
      $region29: #{tpu_custom_call.1} parent=5 // pred_check
        _
      $region30: #{tpu_custom_call.1} parent=5 // pred_check_branch
        %263 = sbr.rel (%p260) target = $region32
      $region31: #{tpu_custom_call.1} parent=5 // pred_region
        %s264 = ssub.s32 %s18, 1
        %s265 = sand.u32 %s49, 1
        %s266 = scalar_lea.sflag [#allocation8], %s265
        %s267 = sand.u32 %s49, 1
        %s268 = smul.addr %s267, 32
        %s269 = scalar_lea.vmem [#allocation7], %s268
        // Predicated region
        $region33: #{tpu_custom_call.1} parent=31 // pred_check
          %p270 = pneg %p62
        $region34: #{tpu_custom_call.1} parent=31 // pred_check_branch
          %272 = sbr.rel (%p270) target = $region36
        $region35: #{tpu_custom_call.1} parent=31 // pred_region
          %273 = dma.done %s266, 512
        $region36: #{tpu_custom_call.1} parent=31 // pred_fallthru
          _
        %s274 = sand.u32 %s81, 1
        %s275 = scalar_lea.sflag [#allocation11], %s274
        %s276 = sand.u32 %s81, 1
        %s277 = smul.addr %s276, 32
        %s278 = scalar_lea.vmem [#allocation10], %s277
        // Predicated region
        $region37: #{tpu_custom_call.1} parent=31 // pred_check
          %p279 = pneg %p94
        $region38: #{tpu_custom_call.1} parent=31 // pred_check_branch
          %281 = sbr.rel (%p279) target = $region40
        $region39: #{tpu_custom_call.1} parent=31 // pred_region
          %282 = dma.done %s275, 512
        $region40: #{tpu_custom_call.1} parent=31 // pred_fallthru
          _
        %s283 = sand.u32 %s49, 1
        %s284 = scalar_lea.sflag [#allocation8], %s283
        %s285 = sand.u32 %s49, 1
        %s286 = smul.addr %s285, 32
        %s287 = scalar_lea.vmem [#allocation7], %s286
        %p288 = pneg %p62
        %p289 = pneg %p59
        %s290 = sand.u32 %s81, 1
        %s291 = scalar_lea.sflag [#allocation11], %s290
        %s292 = sand.u32 %s81, 1
        %s293 = smul.addr %s292, 32
        %s294 = scalar_lea.vmem [#allocation10], %s293
        %p295 = pneg %p94
        %p296 = pneg %p91
        %s297 = sadd.s32 %s27, %s28
        %p298 = scmp.lt.s32.totalorder %s297, 1
        %s299 = scalar_select %p298, %s297, 1
        %s300 = smul.u32 2, %s299
        %s301 = ssub.s32 3, %s300
        %p302 = scmp.lt.s32.totalorder %s301, 2
        %s303 = scalar_select %p302, %s301, 2
        %s304 = smul.u32 128, %s303
        %p305 = scmp.lt.s32.totalorder %s300, 2
        %s306 = scalar_select %p305, %s300, 2
        %s307 = smul.addr %s306, 8
        %s308 = scalar_lea.vmem %s2, %s307
        %p309 = pneg %p126
        %p310 = pneg %p123
        %p311 = pneg %p152
        %p312 = pneg %p149
        %s313 = sand.u32 %s139, 1
        %s314 = scalar_lea.sflag [#allocation9], %s313
        %s315 = sand.u32 %s139, 1
        %s316 = smul.addr %s315, 8
        %s317 = scalar_lea.vmem [#allocation12], %s316
        %s318 = sadd.s32 %s27, %s28
        %p319 = scmp.lt.s32.totalorder %s318, 1
        %s320 = scalar_select %p319, %s318, 1
        %s321 = smul.u32 2, %s320
        %s322 = ssub.s32 3, %s321
        %p323 = scmp.lt.s32.totalorder %s322, 2
        %s324 = scalar_select %p323, %s322, 2
        %s325 = smul.u32 128, %s324
        %s326 = smul.u32 %s325, 2
        %s327 = sadd.s32 %s27, %s28
        %p328 = scmp.lt.s32.totalorder %s327, 1
        %s329 = scalar_select %p328, %s327, 1
        %s330 = smul.u32 2, %s329
        %s331 = ssub.s32 3, %s330
        %p332 = scmp.lt.s32.totalorder %s331, 2
        %s333 = scalar_select %p332, %s331, 2
        %s334 = smul.u32 128, %s333
        %s335 = smul.u32 %s334, 2
        %s336 = sadd.s32 %s27, %s28
        %p337 = scmp.lt.s32.totalorder %s336, 1
        %s338 = scalar_select %p337, %s336, 1
        %s339 = smul.u32 2, %s338
        %s340 = ssub.s32 3, %s339
        %p341 = scmp.lt.s32.totalorder %s340, 2
        %s342 = scalar_select %p341, %s340, 2
        %s343 = smul.u32 128, %s342
        %p344 = scmp.lt.s32.totalorder %s339, 2
        %s345 = scalar_select %p344, %s339, 2
        %s346 = smul.addr %s345, 8
        %s347 = scalar_lea.vmem %s2, %s346
        %s348 = sadd.s32 %s27, %s28
        %p349 = scmp.lt.s32.totalorder %s348, 1
        %s350 = scalar_select %p349, %s348, 1
        %s351 = smul.u32 2, %s350
        %s352 = ssub.s32 3, %s351
        %p353 = scmp.lt.s32.totalorder %s352, 2
        %s354 = scalar_select %p353, %s352, 2
        %s355 = smul.u32 128, %s354
        %p356 = scmp.eq.s32.totalorder %s28, 0
        // Predicated region
        $region41: #{tpu_custom_call.1} parent=31 // pred_check
          %p357 = pneg %p356
        $region42: #{tpu_custom_call.1} parent=31 // pred_check_branch
          %359 = sbr.rel (%p357) target = $region44
        $region43: #{tpu_custom_call.1} parent=31 // pred_region
          %360 = vst [vmem:[#allocation2] sm:$0xff] 0.0
          %361 = vst [vmem:[#allocation2 + $0x8] sm:$0xff] 0.0
          %vm362 = vcmask 7168
          %363 = vst.msk [vmem:[#allocation3] sm:$0xff] %vm362, 0.0
          %364 = vst [vmem:[#allocation4] sm:$0xff] 0.0
          %365 = vst [vmem:[#allocation4 + $0x8] sm:$0xff] 0.0
          %366 = vst.msk [vmem:[#allocation5] sm:$0xff] %vm362, 0.0
          %367 = vst.msk [vmem:[#allocation6] sm:$0xff] %vm362, 0.0
        $region44: #{tpu_custom_call.1} parent=31 // pred_fallthru
          _
        %s368 = sadd.s32 %s27, %s28
        %s369 = smul.u32 %s368, 16
        %v370 = vlaneseq
        %v371 = vshrl.u32 %v370, 7
        %v372 = vadd.s32 %v371, 8
        %v373 = vstv %s369
        %v374 = vadd.s32 %v373, %v371
        %v375 = vadd.s32 %v373, %v372
        %vm376 = vcmp.lt.s32.totalorder %v374, 18
        %vm377 = vcmp.lt.s32.totalorder %v375, 18
        %v378 = vld [vmem:[%s269] sm:$0xff]
        %v379 = vld [vmem:[%s269 + $0x8] sm:$0xff]
        %v380 = vld [vmem:[%s269 + $0x10] sm:$0xff]
        %v381 = vld [vmem:[%s269 + $0x18] sm:$0xff]
        %v382 = vsel %vm376, 1, 0
        %v383 = vsel %vm377, 1, 0
        %vm384 = vcmp.eq.s32.totalorder %v382, 1
        %vm385 = vcmp.eq.s32.totalorder %v383, 1
        %v386 = vsel %vm384, %v378, 0.0
        %v387 = vsel %vm384, %v379, 0.0
        %v388 = vsel %vm385, %v380, 0.0
        %v389 = vsel %vm385, %v381, 0.0
        %v390 = vld [vmem:[%s278] sm:$0xff]
        %v391 = vld [vmem:[%s278 + $0x8] sm:$0xff]
        %v392 = vld [vmem:[%s278 + $0x10] sm:$0xff]
        %v393 = vld [vmem:[%s278 + $0x18] sm:$0xff]
        %v394 = vsel %vm384, %v390, 0.0
        %v395 = vsel %vm384, %v391, 0.0
        %v396 = vsel %vm385, %v392, 0.0
        %v397 = vsel %vm385, %v393, 0.0
        %v398 = vld [vmem:[%s347] sm:$0xff]
        %v399 = vld [vmem:[%s347 + $0x8] sm:$0xff]
        %vm400 = vcmp.ge.s32.totalorder %v398, 0
        %vm401 = vcmp.ge.s32.totalorder %v399, 0
        %vm402 = vmand %vm400, %vm376
        %vm403 = vmand %vm401, %vm377
        %v404 = vsel %vm402, 1, 0
        %v405 = vsel %vm403, 1, 0
        %v406 = vcvt.s32.f32 %v404
        %v407 = vcvt.s32.f32 %v405
        %v408 = vmax.f32 %v386, %v387
        %409 = vmax.xlane.f32.xlu0 %v408
        %v410 = vpop.xlane.xlu0 %409
        %v411 = vmax.f32 %v388, %v389
        %412 = vmax.xlane.f32.xlu0 %v411
        %v413 = vpop.xlane.xlu0 %412
        %v414 = vmax.f32 %v394, %v395
        %415 = vmax.xlane.f32.xlu0 %v414
        %v416 = vpop.xlane.xlu0 %415
        %v417 = vmax.f32 %v396, %v397
        %418 = vmax.xlane.f32.xlu0 %v417
        %v419 = vpop.xlane.xlu0 %418
        %v420 = vsub.f32 %v386, %v410
        %v421 = vsub.f32 %v387, %v410
        %v422 = vsub.f32 %v388, %v413
        %v423 = vsub.f32 %v389, %v413
        %v424 = vmul.f32 %v420, 0.5
        %v425 = vmul.f32 %v421, 0.5
        %v426 = vmul.f32 %v422, 0.5
        %v427 = vmul.f32 %v423, 0.5
        %v428 = vsub.f32 %v394, %v416
        %v429 = vsub.f32 %v395, %v416
        %v430 = vsub.f32 %v396, %v419
        %v431 = vsub.f32 %v397, %v419
        %v432 = vmul.f32 %v428, 0.5
        %v433 = vmul.f32 %v429, 0.5
        %v434 = vmul.f32 %v430, 0.5
        %v435 = vmul.f32 %v431, 0.5
        %v436 = vmul.f32 %v424, 1.442695
        %v437 = vpow.pop %v436
        %v438 = vmul.f32 %v425, 1.442695
        %v439 = vpow.pop %v438
        %v440 = vmul.f32 %v426, 1.442695
        %v441 = vpow.pop %v440
        %v442 = vmul.f32 %v427, 1.442695
        %v443 = vpow.pop %v442
        %v444 = vmul.f32 %v432, 1.442695
        %v445 = vpow.pop %v444
        %v446 = vmul.f32 %v433, 1.442695
        %v447 = vpow.pop %v446
        %v448 = vmul.f32 %v434, 1.442695
        %v449 = vpow.pop %v448
        %v450 = vmul.f32 %v435, 1.442695
        %v451 = vpow.pop %v450
        %v452 = vadd.f32 %v437, %v439
        %453 = vadd.xlane.f32.xlu0 %v452
        %v454 = vpop.xlane.xlu0 %453
        %v455 = vadd.f32 %v441, %v443
        %456 = vadd.xlane.f32.xlu0 %v455
        %v457 = vpop.xlane.xlu0 %456
        %v458 = vadd.f32 %v445, %v447
        %459 = vadd.xlane.f32.xlu0 %v458
        %v460 = vpop.xlane.xlu0 %459
        %v461 = vadd.f32 %v449, %v451
        %462 = vadd.xlane.f32.xlu0 %v461
        %v463 = vpop.xlane.xlu0 %462
        %v464 = vrcp.pop %v460
        %v465 = vmul.f32 1.0, %v464
        %v466 = vrcp.pop %v463
        %v467 = vmul.f32 1.0, %v466
        %v468 = vmul.f32 %v445, %v465
        %v469 = vmul.f32 %v447, %v465
        %v470 = vmul.f32 %v449, %v467
        %v471 = vmul.f32 %v451, %v467
        %v472 = vsub.f32 %v432, %v424
        %v473 = vsub.f32 %v433, %v425
        %v474 = vsub.f32 %v434, %v426
        %v475 = vsub.f32 %v435, %v427
        %v476 = vmul.f32 %v468, %v472
        %v477 = vmul.f32 %v469, %v473
        %v478 = vmul.f32 %v470, %v474
        %v479 = vmul.f32 %v471, %v475
        %v480 = vlog2.pop %v454
        %v481 = vmul.f32 %v480, 0.6931472
        %v482 = vlog2.pop %v457
        %v483 = vmul.f32 %v482, 0.6931472
        %v484 = vlog2.pop %v460
        %v485 = vmul.f32 %v484, 0.6931472
        %v486 = vlog2.pop %v463
        %v487 = vmul.f32 %v486, 0.6931472
        %v488 = vsub.f32 %v481, %v485
        %v489 = vsub.f32 %v483, %v487
        %v490 = vmul.f32 %v420, 1.442695
        %v491 = vpow.pop %v490
        %v492 = vmul.f32 %v421, 1.442695
        %v493 = vpow.pop %v492
        %v494 = vmul.f32 %v422, 1.442695
        %v495 = vpow.pop %v494
        %v496 = vmul.f32 %v423, 1.442695
        %v497 = vpow.pop %v496
        %v498 = vadd.f32 %v491, %v493
        %499 = vadd.xlane.f32.xlu0 %v498
        %v500 = vpop.xlane.xlu0 %499
        %v501 = vadd.f32 %v495, %v497
        %502 = vadd.xlane.f32.xlu0 %v501
        %v503 = vpop.xlane.xlu0 %502
        %v504 = vlog2.pop %v500
        %v505 = vmul.f32 %v504, 0.6931472
        %v506 = vlog2.pop %v503
        %v507 = vmul.f32 %v506, 0.6931472
        %v508 = vadd.f32 %v410, %v505
        %v509 = vadd.f32 %v413, %v507
        %v510 = vmul.f32 %v406, %v508
        %v511 = vmul.f32 %v407, %v509
        %v512 = vlaneseq
        %v513 = vand.u32 %v512, 127
        %v514 = vadd.s32 %v513, 128
        %515 = vset.pattern.permute.xlu0 0
        %516 = vperm.xlu0 %515, %v398
        %v517 = vpop.permute.xlu0 %516
        %518 = vset.pattern.permute.xlu0 0
        %519 = vperm.xlu0 %518, %v399
        %v520 = vpop.permute.xlu0 %519
        %vm521 = vcmp.eq.s32.totalorder %v513, %v517
        %vm522 = vcmp.eq.s32.totalorder %v514, %v517
        %vm523 = vcmp.eq.s32.totalorder %v513, %v520
        %vm524 = vcmp.eq.s32.totalorder %v514, %v520
        %525 = vset.pattern.permute.xlu0 0
        %526 = vperm.xlu0 %525, %v404
        %v527 = vpop.permute.xlu0 %526
        %528 = vset.pattern.permute.xlu0 0
        %529 = vperm.xlu0 %528, %v405
        %v530 = vpop.permute.xlu0 %529
        %vm531 = vcmp.eq.s32.totalorder %v527, 1
        %vm532 = vcmp.eq.s32.totalorder %v530, 1
        %vm533 = vmand %vm521, %vm531
        %vm534 = vmand %vm522, %vm531
        %vm535 = vmand %vm523, %vm532
        %vm536 = vmand %vm524, %vm532
        %v537 = vsel %vm533, %v386, 0.0
        %v538 = vsel %vm534, %v387, 0.0
        %v539 = vsel %vm535, %v388, 0.0
        %v540 = vsel %vm536, %v389, 0.0
        %v541 = vld [vmem:[#allocation2] sm:$0xff]
        %v542 = vld [vmem:[#allocation2 + $0x8] sm:$0xff]
        %v543 = vadd.f32 %v476, %v478
        %v544 = vadd.f32 %v477, %v479
        %v545 = vadd.f32 %v541, %v543
        %v546 = vadd.f32 %v542, %v544
        %547 = vst [vmem:[#allocation2] sm:$0xff] %v545
        %548 = vst [vmem:[#allocation2 + $0x8] sm:$0xff] %v546
        %v549 = vld [vmem:[#allocation3] sm:$0xff]
        %v550 = vadd.f32 %v488, %v489
        %v551 = vadd.f32 %v549, %v550
        %vm552 = vcmask 7168
        %553 = vst.msk [vmem:[#allocation3] sm:$0xff] %vm552, %v551
        %v554 = vld [vmem:[#allocation4] sm:$0xff]
        %v555 = vld [vmem:[#allocation4 + $0x8] sm:$0xff]
        %v556 = vadd.f32 %v537, %v539
        %v557 = vadd.f32 %v538, %v540
        %v558 = vadd.f32 %v554, %v556
        %v559 = vadd.f32 %v555, %v557
        %560 = vst [vmem:[#allocation4] sm:$0xff] %v558
        %561 = vst [vmem:[#allocation4 + $0x8] sm:$0xff] %v559
        %v562 = vld [vmem:[#allocation5] sm:$0xff]
        %v563 = vadd.f32 %v510, %v511
        %v564 = vadd.f32 %v562, %v563
        %565 = vst.msk [vmem:[#allocation5] sm:$0xff] %vm552, %v564
        %v566 = vld [vmem:[#allocation6] sm:$0xff]
        %v567 = vadd.f32 %v406, %v407
        %v568 = vadd.f32 %v566, %v567
        %569 = vst.msk [vmem:[#allocation6] sm:$0xff] %vm552, %v568
        // Predicated region
        $region45: #{tpu_custom_call.1} parent=31 // pred_check
          %p570 = pneg %p356
        $region46: #{tpu_custom_call.1} parent=31 // pred_check_branch
          %572 = sbr.rel (%p570) target = $region48
        $region47: #{tpu_custom_call.1} parent=31 // pred_region
          %v573 = vld [vmem:[#allocation2] sm:$0xff]
          %v574 = vld [vmem:[#allocation2 + $0x8] sm:$0xff]
          %v575 = vadd.f32 %v573, %v574
          %576 = vadd.xlane.f32.xlu0 %v575
          %v577 = vpop.xlane.xlu0 %576
          %v578 = vrot.slane %v577, 4
          %v579 = vadd.f32 %v577, %v578
          %v580 = vrot.slane %v579, 2
          %v581 = vadd.f32 %v579, %v580
          %v582 = vrot.slane %v581, 1
          %v583 = vadd.f32 %v581, %v582
          %s584 = vtos %v583
          %v585 = vld [vmem:[#allocation3] sm:$0xff]
          %v586 = vsel %vm552, %v585, 0.0
          %587 = vadd.xlane.f32.xlu0 %v586
          %v588 = vpop.xlane.xlu0 %587
          %v589 = vrot.slane %v588, 4
          %v590 = vadd.f32 %v588, %v589
          %v591 = vrot.slane %v590, 2
          %v592 = vadd.f32 %v590, %v591
          %v593 = vrot.slane %v592, 1
          %v594 = vadd.f32 %v592, %v593
          %s595 = vtos %v594
          %s596 = sadd.f32 %s584, %s595
          %v597 = vld [vmem:[#allocation5] sm:$0xff]
          %v598 = vsel %vm552, %v597, 0.0
          %599 = vadd.xlane.f32.xlu0 %v598
          %v600 = vpop.xlane.xlu0 %599
          %v601 = vrot.slane %v600, 4
          %v602 = vadd.f32 %v600, %v601
          %v603 = vrot.slane %v602, 2
          %v604 = vadd.f32 %v602, %v603
          %v605 = vrot.slane %v604, 1
          %v606 = vadd.f32 %v604, %v605
          %s607 = vtos %v606
          %v608 = vld [vmem:[#allocation4] sm:$0xff]
          %v609 = vld [vmem:[#allocation4 + $0x8] sm:$0xff]
          %v610 = vadd.f32 %v608, %v609
          %611 = vadd.xlane.f32.xlu0 %v610
          %v612 = vpop.xlane.xlu0 %611
          %v613 = vrot.slane %v612, 4
          %v614 = vadd.f32 %v612, %v613
          %v615 = vrot.slane %v614, 2
          %v616 = vadd.f32 %v614, %v615
          %v617 = vrot.slane %v616, 1
          %v618 = vadd.f32 %v616, %v617
          %s619 = vtos %v618
          %s620 = ssub.f32 %s607, %s619
          %v621 = vld [vmem:[#allocation6] sm:$0xff]
          %v622 = vsel %vm552, %v621, 0.0
          %623 = vadd.xlane.f32.xlu0 %v622
          %v624 = vpop.xlane.xlu0 %623
          %v625 = vrot.slane %v624, 4
          %v626 = vadd.f32 %v624, %v625
          %v627 = vrot.slane %v626, 2
          %v628 = vadd.f32 %v626, %v627
          %v629 = vrot.slane %v628, 1
          %v630 = vadd.f32 %v628, %v629
          %s631 = vtos %v630
          %vm632 = vcmp.eq.s32.totalorder %v371, 0
          %v633 = vstv %s596
          %v634 = vsel %vm632, %v633, 0.0
          %vm635 = vcmp.eq.s32.totalorder %v371, 1
          %v636 = vstv %s620
          %v637 = vsel %vm635, %v636, %v634
          %vm638 = vcmp.eq.s32.totalorder %v371, 2
          %v639 = vstv %s631
          %v640 = vsel %vm638, %v639, %v637
          %641 = vst [vmem:[%s317] sm:$0xff] %v640
        $region48: #{tpu_custom_call.1} parent=31 // pred_fallthru
          _
        %s642 = sand.u32 %s139, 1
        %s643 = scalar_lea.sflag [#allocation9], %s642
        %s644 = sand.u32 %s139, 1
        %s645 = smul.addr %s644, 8
        %s646 = scalar_lea.vmem [#allocation12], %s645
        // Predicated region
        $region49: #{tpu_custom_call.1} parent=31 // pred_check
          %p647 = pneg %p149
        $region50: #{tpu_custom_call.1} parent=31 // pred_check_branch
          %649 = sbr.rel (%p647) target = $region52
        $region51: #{tpu_custom_call.1} parent=31 // pred_region
          %s651 = ssub.s32 128, 128
          %652 = vsyncadd %s643, %s651
          %s653 = smul.addr %s27, 128
          %s654 = scalar_lea.hbm %s3, %s653
          %s656 = sshll.u32 %s646, 4
          %s657 = int_to_ptr.vmem [resolvable:$true] %s656
          %659 = dma.vmem_to_hbm [thread:$0]  %s657, 128, %s654, %s643
        $region52: #{tpu_custom_call.1} parent=31 // pred_fallthru
          _
      $region32: #{tpu_custom_call.1} parent=5 // pred_fallthru
        _
      %p660 = scmp.le.s32.totalorder 2, %s18
      // Predicated region
      $region53: #{tpu_custom_call.1} parent=5 // pred_check
        %p661 = pneg %p660
      $region54: #{tpu_custom_call.1} parent=5 // pred_check_branch
        %663 = sbr.rel (%p661) target = $region56
      $region55: #{tpu_custom_call.1} parent=5 // pred_region
        %s664 = ssub.s32 %s18, 2
        // Predicated region
        $region57: #{tpu_custom_call.1} parent=55 // pred_check
          %p665 = pneg %p155
        $region58: #{tpu_custom_call.1} parent=55 // pred_check_branch
          %667 = sbr.rel (%p665) target = $region60
        $region59: #{tpu_custom_call.1} parent=55 // pred_region
          %s668 = sand.u32 %s140, 1
          %s669 = scalar_lea.sflag [#allocation9], %s668
          %s670 = sand.u32 %s140, 1
          %s671 = smul.addr %s670, 8
          %s672 = scalar_lea.vmem [#allocation12], %s671
          %673 = dma.done %s669, 128
        $region60: #{tpu_custom_call.1} parent=55 // pred_fallthru
          _
      $region56: #{tpu_custom_call.1} parent=5 // pred_fallthru
        _
    $region6: #{tpu_custom_call.1} parent=1 // loop_footer
      %s22 = sadd.s32 1, %s18
    $region7: #{tpu_custom_call.1} parent=1 // loop_footer_branch
      %17 = sbr.rel target = $region3
    $region8: #{tpu_custom_call.1} parent=1 // loop_exit
      _
    %674 = vsyncpa [#allocation8], 1
    %s675 = scalar_lea.sflag [#allocation8], 1
    %676 = vsyncpa %s675, 1
    %677 = vsyncpa [#allocation11], 1
    %s678 = scalar_lea.sflag [#allocation11], 1
    %679 = vsyncpa %s678, 1
    %680 = vsyncpa [#allocation9], 1
    %s681 = scalar_lea.sflag [#allocation9], 1
    %682 = vsyncpa %s681, 1

</llo_original>
